<compile_context>
chip_gen: v7x
topology: tpu7x:2x2x1
jax: 0.10.0
libtpu: 0.0.40
codegen_flags: <defaults>
</compile_context>

<pallas_src>
import math

import numpy as np
import jax
import jax.numpy as jnp
from jax.experimental import pallas as pl
from jax.experimental.pallas import tpu as pltpu


def _round_up(x, m):
    return ((x + m - 1) // m) * m


# ----------------------------------------------------------------------------
# Kernel
# ----------------------------------------------------------------------------
def _gru_kernel(x_ref, h_ref, wx_ref, whg_ref, whc_ref, b_ref, out_ref):
    hp = out_ref.shape[-1]                       # padded hidden size (mult of 128)

    x = x_ref[...]                               # (TM, I)   bf16
    h = h_ref[...]                               # (TM, Hp)  bf16
    h_f32 = h.astype(jnp.float32)

    # x contributes to all three pre-activations; all biases are folded here.
    #   columns: [ z | r | candidate ]
    xg = jnp.dot(x, wx_ref[...], preferred_element_type=jnp.float32) + b_ref[...]
    # h contributes to the two gates (z, r) in one fused matmul.
    hg = jnp.dot(h, whg_ref[...], preferred_element_type=jnp.float32)

    gates = jax.nn.sigmoid(xg[:, : 2 * hp] + hg)     # f32 elementwise (EUP)
    zt = gates[:, :hp]
    rt = gates[:, hp:]

    # Candidate state: (rt*h) part is data-dependent, so it stays a separate dot.
    rh = (rt * h_f32).astype(whc_ref.dtype)          # bf16 into the MXU
    h_tilde = jnp.tanh(
        xg[:, 2 * hp:]
        + jnp.dot(rh, whc_ref[...], preferred_element_type=jnp.float32)
    )

    # (1 - zt)*h + zt*h_tilde  ==  h + zt*(h_tilde - h)
    ht = h_f32 + zt * (h_tilde - h_f32)
    out_ref[...] = ht.astype(out_ref.dtype)


# ----------------------------------------------------------------------------
# One-time weight packing (fuse / transpose / pad / cast)
# ----------------------------------------------------------------------------
def pack_gru_params(params, input_size, hidden_size, compute_dtype=jnp.bfloat16):
    """Pre-pack torch-style Linear weights for the fused kernel (call once)."""
    I, H = input_size, hidden_size
    Hp = _round_up(H, 128)

    def pad2(a, rows, cols):
        return jnp.pad(a, ((0, rows - a.shape[0]), (0, cols - a.shape[1])))

    def pad1(b):
        return jnp.pad(b, (0, Hp - b.shape[0]))

    # wz, wr take cat(x, h):  first I cols are x-part, rest h-part.
    wz_x, wz_h = params["wz_w"][:, :I].T, params["wz_w"][:, I:].T   # (I,H), (H,H)
    wr_x, wr_h = params["wr_w"][:, :I].T, params["wr_w"][:, I:].T
    # w takes cat(rt*h, x): first H cols are h-part, rest x-part.
    w_h, w_x = params["w_w"][:, :H].T, params["w_w"][:, H:].T        # (H,H), (I,H)

    wx = jnp.concatenate(
        [pad2(wz_x, I, Hp), pad2(wr_x, I, Hp), pad2(w_x, I, Hp)], axis=1)   # (I, 3Hp)
    whg = jnp.concatenate(
        [pad2(wz_h, Hp, Hp), pad2(wr_h, Hp, Hp)], axis=1)                   # (Hp, 2Hp)
    whc = pad2(w_h, Hp, Hp)                                                 # (Hp, Hp)

    bias = jnp.concatenate(
        [pad1(params["wz_b"]), pad1(params["wr_b"]), pad1(params["w_b"])]
    ).reshape(1, 3 * Hp)                                                    # (1, 3Hp)

    return {
        "wx": wx.astype(compute_dtype),
        "whg": whg.astype(compute_dtype),
        "whc": whc.astype(compute_dtype),
        "b": bias.astype(jnp.float32),      # added post-matmul, keep f32
        "input_size": I,
        "hidden_size": H,
        "hidden_padded": Hp,
        "compute_dtype": compute_dtype,
    }


# ----------------------------------------------------------------------------
# Wrapper
# ----------------------------------------------------------------------------
def gru_forward(x_input, prev_hidden, packed, *, tile_m=512):
    """Fused GRU cell. x_input: (B,T,I), prev_hidden: (B,T,H) -> (ht, ht)."""
    B, T, I = x_input.shape
    H = prev_hidden.shape[-1]
    assert I == packed["input_size"] and H == packed["hidden_size"]
    Hp = packed["hidden_padded"]
    cd = packed["compute_dtype"]

    M = B * T
    TM = min(tile_m, _round_up(M, 8))       # rows per grid step (mult of 8)
    Mp = _round_up(M, TM)

    # Flatten, cast to MXU dtype, zero-pad rows (to Mp) and hidden cols (to Hp).
    x2d = jnp.pad(x_input.reshape(M, I).astype(cd), ((0, Mp - M), (0, 0)))
    h2d = jnp.pad(prev_hidden.reshape(M, H).astype(cd),
                  ((0, Mp - M), (0, Hp - H)))

    grid = (Mp // TM,)
    row_spec = lambda cols: pl.BlockSpec((TM, cols), lambda i: (i, 0))
    const_spec = lambda shape: pl.BlockSpec(shape, lambda i: (0, 0))

    # VMEM budget: double-buffered activation streams + resident weights.
    isz = np.dtype(cd).itemsize
    stream = 2 * TM * (I * isz + Hp * isz + Hp * 4)
    weights = 2 * (isz * (I * 3 * Hp + Hp * 2 * Hp + Hp * Hp) + 4 * 3 * Hp)
    vmem_limit = int(min(max(stream + weights + (4 << 20), 16 << 20), 64 << 20))

    out = pl.pallas_call(
        _gru_kernel,
        out_shape=jax.ShapeDtypeStruct((Mp, Hp), x_input.dtype),
        grid=grid,
        in_specs=[
            row_spec(I),                # x        (streamed)
            row_spec(Hp),               # h        (streamed)
            const_spec((I, 3 * Hp)),    # fused x-side weights   (resident)
            const_spec((Hp, 2 * Hp)),   # fused h-side gate wts  (resident)
            const_spec((Hp, Hp)),       # candidate h-side wts   (resident)
            const_spec((1, 3 * Hp)),    # fused biases           (resident)
        ],
        out_specs=row_spec(Hp),
        compiler_params=pltpu.CompilerParams(
            dimension_semantics=("parallel",),
            vmem_limit_bytes=vmem_limit,
        ),
    )(x2d, h2d, packed["wx"], packed["whg"], packed["whc"], packed["b"])

    ht = out[:M, :H].reshape(B, T, H)
    return ht, ht


# ----------------------------------------------------------------------------
# Init + reference
# ----------------------------------------------------------------------------
def init_gru_params(key, input_size, hidden_size):
    """Matches nn.Linear's default uniform(-k, k), k = 1/sqrt(fan_in)."""
    fan_in = input_size + hidden_size
    k = 1.0 / math.sqrt(fan_in)
    keys = jax.random.split(key, 6)
    u = lambda kk, shape: jax.random.uniform(kk, shape, jnp.float32, -k, k)
    return {
        "wr_w": u(keys[0], (hidden_size, fan_in)),
        "wr_b": u(keys[1], (hidden_size,)),
        "wz_w": u(keys[2], (hidden_size, fan_in)),
        "wz_b": u(keys[3], (hidden_size,)),
        "w_w":  u(keys[4], (hidden_size, fan_in)),
        "w_b":  u(keys[5], (hidden_size,)),
    }


def _gru_reference(x, h, params):
    """Plain-JAX f32 reference mirroring the PyTorch forward exactly."""
    xh = jnp.concatenate((x, h), axis=2)
    zt = jax.nn.sigmoid(xh @ params["wz_w"].T + params["wz_b"])
    rt = jax.nn.sigmoid(xh @ params["wr_w"].T + params["wr_b"])
    rhx = jnp.concatenate((rt * h, x), axis=2)
    h_tilde = jnp.tanh(rhx @ params["w_w"].T + params["w_b"])
    return (1.0 - zt) * h + zt * h_tilde


if __name__ == "__main__":
    input_size, hidden_size = 16, 32
    B, T = 2, 1   # forward concatenates along dim=2

    key = jax.random.PRNGKey(0)
    kp, kx, kh = jax.random.split(key, 3)
    params = init_gru_params(kp, input_size, hidden_size)
    packed = pack_gru_params(params, input_size, hidden_size)   # one-time packing

    x_input = jax.random.normal(kx, (B, T, input_size), jnp.float32)
    prev_hidden = jax.random.normal(kh, (B, T, hidden_size), jnp.float32)

    ht, ht_copy = gru_forward(x_input, prev_hidden, packed)
    jax.block_until_ready(ht)

    ref = _gru_reference(x_input, prev_hidden, params)
    assert ht.shape == (B, T, hidden_size)
    # bf16 matmul operands (f32 accumulation) -> relaxed tolerance vs f32 reference.
    assert jnp.allclose(ht, ref, atol=5e-2, rtol=5e-2), (
        f"mismatch vs reference (max abs err {float(jnp.max(jnp.abs(ht - ref)))})")
    assert jnp.array_equal(ht, ht_copy)

    print("KERNEL_OK")
</pallas_src>

<mosaic_0001>
module attributes {stable_mosaic.version = 11 : i64} {
  func.func @_gru_kernel(%arg0: i32, %arg1: memref<8x16xbf16, #tpu.memory_space<vmem>>, %arg2: memref<8x128xbf16, #tpu.memory_space<vmem>>, %arg3: memref<16x384xbf16, #tpu.memory_space<vmem>>, %arg4: memref<128x256xbf16, #tpu.memory_space<vmem>>, %arg5: memref<128x128xbf16, #tpu.memory_space<vmem>>, %arg6: memref<1x384xf32, #tpu.memory_space<vmem>>, %arg7: memref<8x128xf32, #tpu.memory_space<vmem>>) attributes {dimension_semantics = [#tpu.dimension_semantics<parallel>], iteration_bounds = array<i64: 1>, scalar_prefetch = 0 : i64, scratch_operands = 0 : i64, tpu.core_type = #tpu.core_type<tc>, window_params = [{transform_indices = @transform_0, window_bounds = array<i64: 8, 16>}, {transform_indices = @transform_1, window_bounds = array<i64: 8, 128>}, {pipeline_mode = #tpu.pipeline_mode<synchronous>, transform_indices = @transform_2, window_bounds = array<i64: 16, 384>}, {pipeline_mode = #tpu.pipeline_mode<synchronous>, transform_indices = @transform_3, window_bounds = array<i64: 128, 256>}, {pipeline_mode = #tpu.pipeline_mode<synchronous>, transform_indices = @transform_4, window_bounds = array<i64: 128, 128>}, {pipeline_mode = #tpu.pipeline_mode<synchronous>, transform_indices = @transform_5, window_bounds = array<i64: 1, 384>}, {transform_indices = @transform_6, window_bounds = array<i64: 8, 128>}]} {
    %c0 = arith.constant 0 : index
    %c0_0 = arith.constant 0 : index
    %0 = vector.load %arg1[%c0, %c0_0] : memref<8x16xbf16, #tpu.memory_space<vmem>>, vector<8x16xbf16>
    %c0_1 = arith.constant 0 : index
    %c0_2 = arith.constant 0 : index
    %1 = vector.load %arg2[%c0_1, %c0_2] : memref<8x128xbf16, #tpu.memory_space<vmem>>, vector<8x128xbf16>
    %2 = arith.extf %1 : vector<8x128xbf16> to vector<8x128xf32>
    %c0_3 = arith.constant 0 : index
    %c0_4 = arith.constant 0 : index
    %3 = vector.load %arg3[%c0_3, %c0_4] : memref<16x384xbf16, #tpu.memory_space<vmem>>, vector<16x384xbf16>
    %cst = arith.constant dense<0.000000e+00> : vector<8x384xf32>
    %4 = tpu.matmul %0, %3, %cst {dimension_numbers = #tpu.dot_dimension_numbers<[1], [0], [0], [1], [0, 0, 1, 1], [], []>} : vector<8x16xbf16>, vector<16x384xbf16>, vector<8x384xf32> -> vector<8x384xf32>
    %c0_5 = arith.constant 0 : index
    %c0_6 = arith.constant 0 : index
    %5 = vector.load %arg6[%c0_5, %c0_6] : memref<1x384xf32, #tpu.memory_space<vmem>>, vector<1x384xf32>
    %6 = vector.broadcast %5 : vector<1x384xf32> to vector<8x384xf32>
    %7 = arith.addf %4, %6 : vector<8x384xf32>
    %c0_7 = arith.constant 0 : index
    %c0_8 = arith.constant 0 : index
    %8 = vector.load %arg4[%c0_7, %c0_8] : memref<128x256xbf16, #tpu.memory_space<vmem>>, vector<128x256xbf16>
    %cst_9 = arith.constant dense<0.000000e+00> : vector<8x256xf32>
    %9 = tpu.matmul %1, %8, %cst_9 {dimension_numbers = #tpu.dot_dimension_numbers<[1], [0], [0], [1], [0, 0, 1, 1], [], []>} : vector<8x128xbf16>, vector<128x256xbf16>, vector<8x256xf32> -> vector<8x256xf32>
    %10 = vector.extract_strided_slice %7 {offsets = [0, 0], sizes = [8, 256], strides = [1, 1]} : vector<8x384xf32> to vector<8x256xf32>
    %11 = arith.addf %10, %9 : vector<8x256xf32>
    %12 = arith.negf %11 : vector<8x256xf32>
    %13 = math.exp %12 : vector<8x256xf32>
    %cst_10 = arith.constant 1.000000e+00 : f32
    %14 = vector.broadcast %cst_10 : f32 to vector<8x256xf32>
    %15 = arith.addf %14, %13 : vector<8x256xf32>
    %16 = arith.divf %14, %15 : vector<8x256xf32>
    %17 = vector.extract_strided_slice %16 {offsets = [0, 0], sizes = [8, 128], strides = [1, 1]} : vector<8x256xf32> to vector<8x128xf32>
    %18 = vector.extract_strided_slice %16 {offsets = [0, 128], sizes = [8, 128], strides = [1, 1]} : vector<8x256xf32> to vector<8x128xf32>
    %19 = arith.mulf %18, %2 : vector<8x128xf32>
    %20 = arith.truncf %19 : vector<8x128xf32> to vector<8x128xbf16>
    %21 = vector.extract_strided_slice %7 {offsets = [0, 256], sizes = [8, 128], strides = [1, 1]} : vector<8x384xf32> to vector<8x128xf32>
    %c0_11 = arith.constant 0 : index
    %c0_12 = arith.constant 0 : index
    %22 = vector.load %arg5[%c0_11, %c0_12] : memref<128x128xbf16, #tpu.memory_space<vmem>>, vector<128x128xbf16>
    %cst_13 = arith.constant dense<0.000000e+00> : vector<8x128xf32>
    %23 = tpu.matmul %20, %22, %cst_13 {dimension_numbers = #tpu.dot_dimension_numbers<[1], [0], [0], [1], [0, 0, 1, 1], [], []>} : vector<8x128xbf16>, vector<128x128xbf16>, vector<8x128xf32> -> vector<8x128xf32>
    %24 = arith.addf %21, %23 : vector<8x128xf32>
    %25 = math.tanh %24 : vector<8x128xf32>
    %26 = arith.subf %25, %2 : vector<8x128xf32>
    %27 = arith.mulf %17, %26 : vector<8x128xf32>
    %28 = arith.addf %2, %27 : vector<8x128xf32>
    %c0_14 = arith.constant 0 : index
    %c0_15 = arith.constant 0 : index
    %29 = vector.load %arg7[%c0_14, %c0_15] : memref<8x128xf32, #tpu.memory_space<vmem>>, vector<8x128xf32>
    tpu.vector_store %arg7[%c0_14, %c0_15], %28 {strides = array<i32>} : memref<8x128xf32, #tpu.memory_space<vmem>>, vector<8x128xf32>,
    return
  }
  func.func @transform_0(%arg0: i32) -> (i32, i32) {
    %c0_i32 = arith.constant 0 : i32
    %c0_i32_0 = arith.constant 0 : i32
    return %arg0, %c0_i32 : i32, i32
  }
  func.func @transform_1(%arg0: i32) -> (i32, i32) {
    %c0_i32 = arith.constant 0 : i32
    %c0_i32_0 = arith.constant 0 : i32
    return %arg0, %c0_i32 : i32, i32
  }
  func.func @transform_2(%arg0: i32) -> (i32, i32) {
    %c0_i32 = arith.constant 0 : i32
    %c0_i32_0 = arith.constant 0 : i32
    %c0_i32_1 = arith.constant 0 : i32
    return %c0_i32, %c0_i32_0 : i32, i32
  }
  func.func @transform_3(%arg0: i32) -> (i32, i32) {
    %c0_i32 = arith.constant 0 : i32
    %c0_i32_0 = arith.constant 0 : i32
    %c0_i32_1 = arith.constant 0 : i32
    return %c0_i32, %c0_i32_0 : i32, i32
  }
  func.func @transform_4(%arg0: i32) -> (i32, i32) {
    %c0_i32 = arith.constant 0 : i32
    %c0_i32_0 = arith.constant 0 : i32
    %c0_i32_1 = arith.constant 0 : i32
    return %c0_i32, %c0_i32_0 : i32, i32
  }
  func.func @transform_5(%arg0: i32) -> (i32, i32) {
    %c0_i32 = arith.constant 0 : i32
    %c0_i32_0 = arith.constant 0 : i32
    %c0_i32_1 = arith.constant 0 : i32
    return %c0_i32, %c0_i32_0 : i32, i32
  }
  func.func @transform_6(%arg0: i32) -> (i32, i32) {
    %c0_i32 = arith.constant 0 : i32
    %c0_i32_0 = arith.constant 0 : i32
    return %arg0, %c0_i32 : i32, i32
  }
}

</mosaic_0001>

<llo_original>
// kernel: tpu_custom_call.1
$region0: #{tpu_custom_call.1}
  #allocation0 [shape = 'u32[]', space=smem, size = 0x4, offset = 0x4, fixed_abs, tag = 'smem constant byte address 0x4 - core index']
  #allocation1 [shape = 'u32[144,128]{1,0:T(1,128)}', space=vmem, size = 0x12000, scoped, tag = 'internal scratch']
  %s0 = inlined_call_operand.hbm [shape: bf16[8,16], index: 0, kind: input, shape index: {}]
  %s1 = inlined_call_operand.hbm [shape: bf16[8,128], index: 1, kind: input, shape index: {}]
  %s2 = inlined_call_operand.hbm [shape: bf16[16,384], index: 2, kind: input, shape index: {}]
  %s3 = inlined_call_operand.hbm [shape: bf16[128,256], index: 3, kind: input, shape index: {}]
  %s4 = inlined_call_operand.hbm [shape: bf16[128,128], index: 4, kind: input, shape index: {}]
  %s5 = inlined_call_operand.vmem [shape: f32[1,384], index: 5, kind: input, shape index: {}]
  %s6 = inlined_call_operand.hbm [shape: f32[8,128], index: 6, kind: output, shape index: {}]
  %s7 = sld [smem:[#allocation0]]
  $region54: #{tpu_custom_call.1} parent=0
    _
  %s9 = ssub.s32 1, %s7
  %s10 = scalar_select 0, %s9, %s7
  $region1: #{tpu_custom_call.1} parent=0
    #allocation2 [shape = 'u8[2048]{0}', space=vmem, size = 0x800, scoped, tag = 'input window, operand 0, single buffered']
    #allocation3 [shape = 's32[1]{0}', space=sflag, size = 0x4, scoped, tag = 'scoped memory for tpu_custom_call.1']
    #allocation4 [shape = 's32[1]{0}', space=sflag, size = 0x4, scoped, tag = 'scoped memory for tpu_custom_call.1']
    #allocation5 [shape = 'u8[2048]{0}', space=vmem, size = 0x800, scoped, tag = 'input window, operand 1, single buffered']
    #allocation6 [shape = 's32[1]{0}', space=sflag, size = 0x4, scoped, tag = 'scoped memory for tpu_custom_call.1']
    #allocation7 [shape = 'u8[12288]{0}', space=vmem, size = 0x3000, scoped, tag = 'input window, operand 2, single buffered']
    #allocation8 [shape = 'u8[65536]{0}', space=vmem, size = 0x10000, scoped, tag = 'input window, operand 3, single buffered']
    #allocation9 [shape = 's32[1]{0}', space=sflag, size = 0x4, scoped, tag = 'scoped memory for tpu_custom_call.1']
    #allocation10 [shape = 'u8[32768]{0}', space=vmem, size = 0x8000, scoped, tag = 'input window, operand 4, single buffered']
    #allocation11 [shape = 'u8[4096]{0}', space=vmem, size = 0x1000, scoped, tag = 'output window, operand 0, single buffered']
    %11 = vsyncpa [#allocation3], 0
    %12 = vsyncpa [#allocation6], 0
    %13 = vsyncpa [#allocation9], 0
    %14 = vsyncpa [#allocation4], 0
    // Predicated region
    $region2: #{tpu_custom_call.1} parent=1 // pred_check
      _
    $region3: #{tpu_custom_call.1} parent=1 // pred_check_branch
      %16 = sbr.rel (0) target = $region5
    $region4: #{tpu_custom_call.1} parent=1 // pred_region
      %s18 = ssub.s32 64, 64
      %19 = vsyncadd [#allocation3], %s18
      %s21 = sshll.u32 [#allocation2], 4
      %s22 = int_to_ptr.vmem [resolvable:$true] %s21
      %24 = dma.hbm_to_vmem [thread:$0]  %s0, 64, %s22, [#allocation3]
    $region5: #{tpu_custom_call.1} parent=1 // pred_fallthru
      _
    // Predicated region
    $region6: #{tpu_custom_call.1} parent=1 // pred_check
      _
    $region7: #{tpu_custom_call.1} parent=1 // pred_check_branch
      %26 = sbr.rel (0) target = $region9
    $region8: #{tpu_custom_call.1} parent=1 // pred_region
      %s28 = ssub.s32 64, 64
      %29 = vsyncadd [#allocation6], %s28
      %s31 = sshll.u32 [#allocation5], 4
      %s32 = int_to_ptr.vmem [resolvable:$true] %s31
      %34 = dma.hbm_to_vmem [thread:$0]  %s1, 64, %s32, [#allocation6]
    $region9: #{tpu_custom_call.1} parent=1 // pred_fallthru
      _
    // Predicated region
    $region10: #{tpu_custom_call.1} parent=1 // pred_check
      _
    $region11: #{tpu_custom_call.1} parent=1 // pred_check_branch
      %36 = sbr.rel (0) target = $region13
    $region12: #{tpu_custom_call.1} parent=1 // pred_region
      %s38 = ssub.s32 384, 384
      %39 = vsyncadd [#allocation6], %s38
      %s40 = sshll.u32 [#allocation7], 4
      %s41 = int_to_ptr.vmem [resolvable:$true] %s40
      %46 = dma.hbm_to_vmem [thread:$0]  %s2, 384, %s41, [#allocation6], 192, 192, 12
    $region13: #{tpu_custom_call.1} parent=1 // pred_fallthru
      _
    // Predicated region
    $region14: #{tpu_custom_call.1} parent=1 // pred_check
      _
    $region15: #{tpu_custom_call.1} parent=1 // pred_check_branch
      %48 = sbr.rel (0) target = $region17
    $region16: #{tpu_custom_call.1} parent=1 // pred_region
      %s50 = ssub.s32 2048, 2048
      %51 = vsyncadd [#allocation9], %s50
      %s52 = sshll.u32 [#allocation8], 4
      %s53 = int_to_ptr.vmem [resolvable:$true] %s52
      %58 = dma.hbm_to_vmem [thread:$0]  %s3, 2048, %s53, [#allocation9], 128, 128, 8
    $region17: #{tpu_custom_call.1} parent=1 // pred_fallthru
      _
    // Predicated region
    $region18: #{tpu_custom_call.1} parent=1 // pred_check
      _
    $region19: #{tpu_custom_call.1} parent=1 // pred_check_branch
      %60 = sbr.rel (0) target = $region21
    $region20: #{tpu_custom_call.1} parent=1 // pred_region
      %s62 = ssub.s32 1024, 1024
      %63 = vsyncadd [#allocation9], %s62
      %s64 = sshll.u32 [#allocation10], 4
      %s65 = int_to_ptr.vmem [resolvable:$true] %s64
      %70 = dma.hbm_to_vmem [thread:$0]  %s4, 1024, %s65, [#allocation9], 64, 64, 4
    $region21: #{tpu_custom_call.1} parent=1 // pred_fallthru
      _
    // Predicated region
    $region22: #{tpu_custom_call.1} parent=1 // pred_check
      _
    $region23: #{tpu_custom_call.1} parent=1 // pred_check_branch
      %72 = sbr.rel (0) target = $region25
    $region24: #{tpu_custom_call.1} parent=1 // pred_region
      _
    $region25: #{tpu_custom_call.1} parent=1 // pred_fallthru
      _
    // Predicated region
    $region26: #{tpu_custom_call.1} parent=1 // pred_check
      _
    $region27: #{tpu_custom_call.1} parent=1 // pred_check_branch
      %74 = sbr.rel (0) target = $region29
    $region28: #{tpu_custom_call.1} parent=1 // pred_region
      %75 = dma.done [#allocation3], 64
    $region29: #{tpu_custom_call.1} parent=1 // pred_fallthru
      _
    // Predicated region
    $region30: #{tpu_custom_call.1} parent=1 // pred_check
      _
    $region31: #{tpu_custom_call.1} parent=1 // pred_check_branch
      %77 = sbr.rel (0) target = $region33
    $region32: #{tpu_custom_call.1} parent=1 // pred_region
      %78 = dma.done [#allocation6], 64
    $region33: #{tpu_custom_call.1} parent=1 // pred_fallthru
      _
    // Predicated region
    $region34: #{tpu_custom_call.1} parent=1 // pred_check
      _
    $region35: #{tpu_custom_call.1} parent=1 // pred_check_branch
      %80 = sbr.rel (0) target = $region37
    $region36: #{tpu_custom_call.1} parent=1 // pred_region
      %81 = dma.done [#allocation6], 384
    $region37: #{tpu_custom_call.1} parent=1 // pred_fallthru
      _
    // Predicated region
    $region38: #{tpu_custom_call.1} parent=1 // pred_check
      _
    $region39: #{tpu_custom_call.1} parent=1 // pred_check_branch
      %83 = sbr.rel (0) target = $region41
    $region40: #{tpu_custom_call.1} parent=1 // pred_region
      %84 = dma.done [#allocation9], 2048
    $region41: #{tpu_custom_call.1} parent=1 // pred_fallthru
      _
    // Predicated region
    $region42: #{tpu_custom_call.1} parent=1 // pred_check
      _
    $region43: #{tpu_custom_call.1} parent=1 // pred_check_branch
      %86 = sbr.rel (0) target = $region45
    $region44: #{tpu_custom_call.1} parent=1 // pred_region
      %87 = dma.done [#allocation9], 1024
    $region45: #{tpu_custom_call.1} parent=1 // pred_fallthru
      _
    %v89 = vld [vmem:[#allocation2] sm:$0xf]
    %v90 = vld [vmem:[#allocation5] sm:$0xf]
    %v91 = vunpack.c.l.bf16 %v90
    %v92 = vld [vmem:[#allocation7] sm:$0xff]
    %v93 = vld [vmem:[#allocation7 + $0x8] sm:$0xf]
    %v94 = vld [vmem:[#allocation7 + $0xc] sm:$0xff]
    %v95 = vld [vmem:[#allocation7 + $0x14] sm:$0xf]
    %v96 = vld [vmem:[%s5] sm:$0x7]
    %v98 = vlaneseq
    %v99 = vshrl.u32 %v98, 7
    %v100 = vsub.s32 0, %v99
    %v101 = vrot.slane %v96, %v100
    %v102 = vlaneseq
    %v103 = vshrl.u32 %v102, 7
    %v104 = vsub.s32 1, %v103
    %v105 = vrot.slane %v96, %v104
    %v106 = vlaneseq
    %v107 = vshrl.u32 %v106, 7
    %v108 = vsub.s32 2, %v107
    %v109 = vrot.slane %v96, %v108
    %v117 = vunpack.c.l.b16 %v92
    %v118 = vunpack.c.h.b16 %v92
    %v119 = vunpack.c.l.b16 %v93
    %v120 = vunpack.c.l.b16 %v94
    %v121 = vunpack.c.h.b16 %v94
    %v122 = vunpack.c.l.b16 %v95
    %v123 = vpack.c.b16 %v120, %v117
    %v124 = vpack.c.b16 %v121, %v118
    %v125 = vpack.c.b16 %v122, %v119
    %vm129 = vcmask 130048
    %v131 = vsel %vm129, %v89, 0
    %133 = vmatprep.subr.bf16.mxu0 %v124
    %134 = vmatpush1.bf16.msra.mxu0 %v123
    %135 = vmatprep.subr.bf16.mxu0 0
    %136 = vmatpush1.bf16.msra.mxu0 0
    %137 = vmatprep.subr.bf16.mxu0 0
    %138 = vmatpush1.bf16.msra.mxu0 0
    %139 = vmatprep.subr.bf16.mxu0 0
    %140 = vmatpush1.bf16.msra.mxu0 0
    %141 = vmatprep.subr.bf16.mxu0 0
    %142 = vmatpush1.bf16.msra.mxu0 0
    %143 = vmatprep.subr.bf16.mxu0 0
    %144 = vmatpush1.bf16.msra.mxu0 0
    %145 = vmatprep.subr.bf16.mxu0 0
    %146 = vmatpush1.bf16.msra.mxu0 0
    %147 = vmatprep.subr.bf16.mxu0 0
    %148 = vmatpush1.bf16.msra.mxu0 0
    %149 = vmatprep.subr.bf16.mxu0 0
    %150 = vmatpush1.bf16.msra.mxu0 0
    %151 = vmatprep.subr.bf16.mxu0 0
    %152 = vmatpush1.bf16.msra.mxu0 0
    %153 = vmatprep.subr.bf16.mxu0 0
    %154 = vmatpush1.bf16.msra.mxu0 0
    %155 = vmatprep.subr.bf16.mxu0 0
    %156 = vmatpush1.bf16.msra.mxu0 0
    %157 = vmatprep.subr.bf16.mxu0 0
    %158 = vmatpush1.bf16.msra.mxu0 0
    %159 = vmatprep.subr.bf16.mxu0 0
    %160 = vmatpush1.bf16.msra.mxu0 0
    %161 = vmatprep.subr.bf16.mxu0 0
    %162 = vmatpush1.bf16.msra.mxu0 0
    %163 = vmatprep.subr.bf16.mxu0 0
    %164 = vmatpush1.bf16.msra.mxu0 0
    %165 = vmatprep.mubr.bf16.mxu0 0
    %166 = vmatmul.mubr.bf16.gmra.mrb[0].mxu0 %v131
    %v167 = vpop.f32.mrb[0].mxu0
    %v168 = vadd.f32 %v101, %v167
    %v169 = vpop.f32.mrb[0].mxu0
    %v170 = vadd.f32 %v105, %v169
    %v171 = vpop.f32.mrb[0].mxu0
    %v172 = vpop.f32.mrb[0].mxu0
    %173 = vdwg.mxu0
    %174 = vmatprep.subr.bf16.mxu0 0
    %175 = vmatpush1.bf16.msra.mxu0 %v125
    %176 = vmatprep.subr.bf16.mxu0 0
    %177 = vmatpush1.bf16.msra.mxu0 0
    %178 = vmatprep.subr.bf16.mxu0 0
    %179 = vmatpush1.bf16.msra.mxu0 0
    %180 = vmatprep.subr.bf16.mxu0 0
    %181 = vmatpush1.bf16.msra.mxu0 0
    %182 = vmatprep.subr.bf16.mxu0 0
    %183 = vmatpush1.bf16.msra.mxu0 0
    %184 = vmatprep.subr.bf16.mxu0 0
    %185 = vmatpush1.bf16.msra.mxu0 0
    %186 = vmatprep.subr.bf16.mxu0 0
    %187 = vmatpush1.bf16.msra.mxu0 0
    %188 = vmatprep.subr.bf16.mxu0 0
    %189 = vmatpush1.bf16.msra.mxu0 0
    %190 = vmatprep.subr.bf16.mxu0 0
    %191 = vmatpush1.bf16.msra.mxu0 0
    %192 = vmatprep.subr.bf16.mxu0 0
    %193 = vmatpush1.bf16.msra.mxu0 0
    %194 = vmatprep.subr.bf16.mxu0 0
    %195 = vmatpush1.bf16.msra.mxu0 0
    %196 = vmatprep.subr.bf16.mxu0 0
    %197 = vmatpush1.bf16.msra.mxu0 0
    %198 = vmatprep.subr.bf16.mxu0 0
    %199 = vmatpush1.bf16.msra.mxu0 0
    %200 = vmatprep.subr.bf16.mxu0 0
    %201 = vmatpush1.bf16.msra.mxu0 0
    %202 = vmatprep.subr.bf16.mxu0 0
    %203 = vmatpush1.bf16.msra.mxu0 0
    %204 = vmatprep.subr.bf16.mxu0 0
    %205 = vmatpush1.bf16.msra.mxu0 0
    %206 = vmatprep.mubr.bf16.mxu0 0
    %207 = vmatmul.mubr.bf16.gmra.mrb[0].mxu0 %v131
    %v208 = vpop.f32.mrb[0].mxu0
    %v209 = vadd.f32 %v109, %v208
    %v210 = vpop.f32.mrb[0].mxu0
    %v211 = vpop.f32.mrb[0].mxu0
    %v212 = vpop.f32.mrb[0].mxu0
    %213 = vdwg.mxu0
    %v214 = vld [vmem:[#allocation8] sm:$0xff]
    %v215 = vld [vmem:[#allocation8 + $0x8] sm:$0xff]
    %v216 = vld [vmem:[#allocation8 + $0x10] sm:$0xff]
    %v217 = vld [vmem:[#allocation8 + $0x18] sm:$0xff]
    %v218 = vld [vmem:[#allocation8 + $0x20] sm:$0xff]
    %v219 = vld [vmem:[#allocation8 + $0x28] sm:$0xff]
    %v220 = vld [vmem:[#allocation8 + $0x30] sm:$0xff]
    %v221 = vld [vmem:[#allocation8 + $0x38] sm:$0xff]
    %v222 = vld [vmem:[#allocation8 + $0x40] sm:$0xff]
    %v223 = vld [vmem:[#allocation8 + $0x48] sm:$0xff]
    %v224 = vld [vmem:[#allocation8 + $0x50] sm:$0xff]
    %v225 = vld [vmem:[#allocation8 + $0x58] sm:$0xff]
    %v226 = vld [vmem:[#allocation8 + $0x60] sm:$0xff]
    %v227 = vld [vmem:[#allocation8 + $0x68] sm:$0xff]
    %v228 = vld [vmem:[#allocation8 + $0x70] sm:$0xff]
    %v229 = vld [vmem:[#allocation8 + $0x78] sm:$0xff]
    %v246 = vunpack.c.l.b16 %v214
    %v247 = vunpack.c.h.b16 %v214
    %v248 = vunpack.c.l.b16 %v215
    %v249 = vunpack.c.h.b16 %v215
    %v250 = vunpack.c.l.b16 %v216
    %v251 = vunpack.c.h.b16 %v216
    %v252 = vunpack.c.l.b16 %v217
    %v253 = vunpack.c.h.b16 %v217
    %v254 = vunpack.c.l.b16 %v218
    %v255 = vunpack.c.h.b16 %v218
    %v256 = vunpack.c.l.b16 %v219
    %v257 = vunpack.c.h.b16 %v219
    %v258 = vunpack.c.l.b16 %v220
    %v259 = vunpack.c.h.b16 %v220
    %v260 = vunpack.c.l.b16 %v221
    %v261 = vunpack.c.h.b16 %v221
    %v262 = vunpack.c.l.b16 %v222
    %v263 = vunpack.c.h.b16 %v222
    %v264 = vunpack.c.l.b16 %v223
    %v265 = vunpack.c.h.b16 %v223
    %v266 = vunpack.c.l.b16 %v224
    %v267 = vunpack.c.h.b16 %v224
    %v268 = vunpack.c.l.b16 %v225
    %v269 = vunpack.c.h.b16 %v225
    %v270 = vunpack.c.l.b16 %v226
    %v271 = vunpack.c.h.b16 %v226
    %v272 = vunpack.c.l.b16 %v227
    %v273 = vunpack.c.h.b16 %v227
    %v274 = vunpack.c.l.b16 %v228
    %v275 = vunpack.c.h.b16 %v228
    %v276 = vunpack.c.l.b16 %v229
    %v277 = vunpack.c.h.b16 %v229
    %v278 = vpack.c.b16 %v248, %v246
    %v279 = vpack.c.b16 %v249, %v247
    %v280 = vpack.c.b16 %v252, %v250
    %v281 = vpack.c.b16 %v253, %v251
    %v282 = vpack.c.b16 %v256, %v254
    %v283 = vpack.c.b16 %v257, %v255
    %v284 = vpack.c.b16 %v260, %v258
    %v285 = vpack.c.b16 %v261, %v259
    %v286 = vpack.c.b16 %v264, %v262
    %v287 = vpack.c.b16 %v265, %v263
    %v288 = vpack.c.b16 %v268, %v266
    %v289 = vpack.c.b16 %v269, %v267
    %v290 = vpack.c.b16 %v272, %v270
    %v291 = vpack.c.b16 %v273, %v271
    %v292 = vpack.c.b16 %v276, %v274
    %v293 = vpack.c.b16 %v277, %v275
    %310 = vmatprep.subr.bf16.mxu0 %v279
    %311 = vmatpush1.bf16.msra.mxu0 %v278
    %312 = vmatprep.subr.bf16.mxu0 %v281
    %313 = vmatpush1.bf16.msra.mxu0 %v280
    %314 = vmatprep.subr.bf16.mxu0 %v283
    %315 = vmatpush1.bf16.msra.mxu0 %v282
    %316 = vmatprep.subr.bf16.mxu0 %v285
    %317 = vmatpush1.bf16.msra.mxu0 %v284
    %318 = vmatprep.subr.bf16.mxu0 %v287
    %319 = vmatpush1.bf16.msra.mxu0 %v286
    %320 = vmatprep.subr.bf16.mxu0 %v289
    %321 = vmatpush1.bf16.msra.mxu0 %v288
    %322 = vmatprep.subr.bf16.mxu0 %v291
    %323 = vmatpush1.bf16.msra.mxu0 %v290
    %324 = vmatprep.subr.bf16.mxu0 %v293
    %325 = vmatpush1.bf16.msra.mxu0 %v292
    %326 = vmatprep.subr.bf16.mxu0 0
    %327 = vmatpush1.bf16.msra.mxu0 0
    %328 = vmatprep.subr.bf16.mxu0 0
    %329 = vmatpush1.bf16.msra.mxu0 0
    %330 = vmatprep.subr.bf16.mxu0 0
    %331 = vmatpush1.bf16.msra.mxu0 0
    %332 = vmatprep.subr.bf16.mxu0 0
    %333 = vmatpush1.bf16.msra.mxu0 0
    %334 = vmatprep.subr.bf16.mxu0 0
    %335 = vmatpush1.bf16.msra.mxu0 0
    %336 = vmatprep.subr.bf16.mxu0 0
    %337 = vmatpush1.bf16.msra.mxu0 0
    %338 = vmatprep.subr.bf16.mxu0 0
    %339 = vmatpush1.bf16.msra.mxu0 0
    %340 = vmatprep.subr.bf16.mxu0 0
    %341 = vmatpush1.bf16.msra.mxu0 0
    %342 = vmatprep.mubr.bf16.mxu0 0
    %343 = vmatmul.mubr.bf16.gmra.mrb[0].mxu0 %v90
    %v344 = vpop.f32.mrb[0].mxu0
    %v345 = vadd.f32 0.0, %v344
    %v346 = vpop.f32.mrb[0].mxu0
    %v347 = vadd.f32 0.0, %v346
    %v348 = vpop.f32.mrb[0].mxu0
    %v349 = vpop.f32.mrb[0].mxu0
    %350 = vdwg.mxu0
    %v351 = vadd.f32 %v168, %v345
    %v352 = vadd.f32 %v170, %v347
    %v353 = vxor.u32 %v351, 2147483648
    %v354 = vxor.u32 %v352, 2147483648
    %v355 = vmul.f32 %v353, 1.442695
    %v356 = vpow.pop %v355
    %v357 = vmul.f32 %v354, 1.442695
    %v358 = vpow.pop %v357
    %v359 = vadd.f32 %v356, 1.0
    %v360 = vadd.f32 %v358, 1.0
    %v361 = vrcp.pop %v359
    %v362 = vmul.f32 1.0, %v361
    %v363 = vrcp.pop %v360
    %v364 = vmul.f32 1.0, %v363
    %v365 = vmul.f32 %v364, %v91
    %v366 = vpack.c.bf16 %v365, %v365
    %v367 = vld [vmem:[#allocation10] sm:$0xf]
    %v368 = vld [vmem:[#allocation10 + $0x4] sm:$0xf]
    %v369 = vld [vmem:[#allocation10 + $0x8] sm:$0xf]
    %v370 = vld [vmem:[#allocation10 + $0xc] sm:$0xf]
    %v371 = vld [vmem:[#allocation10 + $0x10] sm:$0xf]
    %v372 = vld [vmem:[#allocation10 + $0x14] sm:$0xf]
    %v373 = vld [vmem:[#allocation10 + $0x18] sm:$0xf]
    %v374 = vld [vmem:[#allocation10 + $0x1c] sm:$0xf]
    %v375 = vld [vmem:[#allocation10 + $0x20] sm:$0xf]
    %v376 = vld [vmem:[#allocation10 + $0x24] sm:$0xf]
    %v377 = vld [vmem:[#allocation10 + $0x28] sm:$0xf]
    %v378 = vld [vmem:[#allocation10 + $0x2c] sm:$0xf]
    %v379 = vld [vmem:[#allocation10 + $0x30] sm:$0xf]
    %v380 = vld [vmem:[#allocation10 + $0x34] sm:$0xf]
    %v381 = vld [vmem:[#allocation10 + $0x38] sm:$0xf]
    %v382 = vld [vmem:[#allocation10 + $0x3c] sm:$0xf]
    %v399 = vunpack.c.l.b16 %v367
    %v400 = vunpack.c.l.b16 %v368
    %v401 = vunpack.c.l.b16 %v369
    %v402 = vunpack.c.l.b16 %v370
    %v403 = vunpack.c.l.b16 %v371
    %v404 = vunpack.c.l.b16 %v372
    %v405 = vunpack.c.l.b16 %v373
    %v406 = vunpack.c.l.b16 %v374
    %v407 = vunpack.c.l.b16 %v375
    %v408 = vunpack.c.l.b16 %v376
    %v409 = vunpack.c.l.b16 %v377
    %v410 = vunpack.c.l.b16 %v378
    %v411 = vunpack.c.l.b16 %v379
    %v412 = vunpack.c.l.b16 %v380
    %v413 = vunpack.c.l.b16 %v381
    %v414 = vunpack.c.l.b16 %v382
    %v415 = vpack.c.b16 %v400, %v399
    %v416 = vpack.c.b16 %v402, %v401
    %v417 = vpack.c.b16 %v404, %v403
    %v418 = vpack.c.b16 %v406, %v405
    %v419 = vpack.c.b16 %v408, %v407
    %v420 = vpack.c.b16 %v410, %v409
    %v421 = vpack.c.b16 %v412, %v411
    %v422 = vpack.c.b16 %v414, %v413
    %431 = vmatprep.subr.bf16.mxu0 0
    %432 = vmatpush1.bf16.msra.mxu0 %v415
    %433 = vmatprep.subr.bf16.mxu0 0
    %434 = vmatpush1.bf16.msra.mxu0 %v416
    %435 = vmatprep.subr.bf16.mxu0 0
    %436 = vmatpush1.bf16.msra.mxu0 %v417
    %437 = vmatprep.subr.bf16.mxu0 0
    %438 = vmatpush1.bf16.msra.mxu0 %v418
    %439 = vmatprep.subr.bf16.mxu0 0
    %440 = vmatpush1.bf16.msra.mxu0 %v419
    %441 = vmatprep.subr.bf16.mxu0 0
    %442 = vmatpush1.bf16.msra.mxu0 %v420
    %443 = vmatprep.subr.bf16.mxu0 0
    %444 = vmatpush1.bf16.msra.mxu0 %v421
    %445 = vmatprep.subr.bf16.mxu0 0
    %446 = vmatpush1.bf16.msra.mxu0 %v422
    %447 = vmatprep.subr.bf16.mxu0 0
    %448 = vmatpush1.bf16.msra.mxu0 0
    %449 = vmatprep.subr.bf16.mxu0 0
    %450 = vmatpush1.bf16.msra.mxu0 0
    %451 = vmatprep.subr.bf16.mxu0 0
    %452 = vmatpush1.bf16.msra.mxu0 0
    %453 = vmatprep.subr.bf16.mxu0 0
    %454 = vmatpush1.bf16.msra.mxu0 0
    %455 = vmatprep.subr.bf16.mxu0 0
    %456 = vmatpush1.bf16.msra.mxu0 0
    %457 = vmatprep.subr.bf16.mxu0 0
    %458 = vmatpush1.bf16.msra.mxu0 0
    %459 = vmatprep.subr.bf16.mxu0 0
    %460 = vmatpush1.bf16.msra.mxu0 0
    %461 = vmatprep.subr.bf16.mxu0 0
    %462 = vmatpush1.bf16.msra.mxu0 0
    %463 = vmatprep.mubr.bf16.mxu0 0
    %464 = vmatmul.mubr.bf16.gmra.mrb[0].mxu0 %v366
    %v465 = vpop.f32.mrb[0].mxu0
    %v466 = vadd.f32 0.0, %v465
    %v467 = vpop.f32.mrb[0].mxu0
    %v468 = vpop.f32.mrb[0].mxu0
    %v469 = vpop.f32.mrb[0].mxu0
    %470 = vdwg.mxu0
    %v471 = vadd.f32 %v209, %v466
    %v472 = vtanh.pop %v471
    %v473 = vsub.f32 %v472, %v91
    %v474 = vmul.f32 %v362, %v473
    %v475 = vadd.f32 %v91, %v474
    %476 = vst [vmem:[#allocation11] sm:$0xff] %v475
    // Predicated region
    $region46: #{tpu_custom_call.1} parent=1 // pred_check
      _
    $region47: #{tpu_custom_call.1} parent=1 // pred_check_branch
      %478 = sbr.rel (0) target = $region49
    $region48: #{tpu_custom_call.1} parent=1 // pred_region
      %s480 = ssub.s32 128, 128
      %481 = vsyncadd [#allocation4], %s480
      %s483 = sshll.u32 [#allocation11], 4
      %s484 = int_to_ptr.vmem [resolvable:$true] %s483
      %486 = dma.vmem_to_hbm [thread:$0]  %s484, 128, %s6, [#allocation4]
    $region49: #{tpu_custom_call.1} parent=1 // pred_fallthru
      _
    // Predicated region
    $region50: #{tpu_custom_call.1} parent=1 // pred_check
      _
    $region51: #{tpu_custom_call.1} parent=1 // pred_check_branch
      %488 = sbr.rel (0) target = $region53
    $region52: #{tpu_custom_call.1} parent=1 // pred_region
      %489 = dma.done [#allocation4], 128
    $region53: #{tpu_custom_call.1} parent=1 // pred_fallthru
      _
    %490 = vsyncpa [#allocation3], 1
    %491 = vsyncpa [#allocation6], 1
    %492 = vsyncpa [#allocation9], 1
    %493 = vsyncpa [#allocation4], 1

</llo_original>
